<compile_context>
chip_gen: v7x
topology: tpu7x:2x2x1
jax: 0.10.0
libtpu: 0.0.40
codegen_flags: <defaults>
</compile_context>

<pallas_src>
import jax
import jax.numpy as jnp
from jax.experimental import pallas as pl
from jax.experimental.pallas import tpu as pltpu

OTHER_METRICS_KEY = "other_metrics"
PAD_ID = -100  # matches F.cross_entropy default ignore_index (padding is < 0)


# ----------------------------------------------------------------------------
# Tiling / VMEM-budget helpers (per-generation)
# ----------------------------------------------------------------------------
def _round_up(x, m):
    return ((x + m - 1) // m) * m


def _vmem_cap_bytes():
    """Scoped-VMEM budget per chip generation."""
    phys = 128 << 20
    try:
        info = pltpu.get_tpu_info()
        phys = int(getattr(info, "vmem_capacity_bytes", phys))
    except Exception:
        pass
    if phys <= (64 << 20):       # v7x-class: leave headroom for compiler scratch
        return 48 << 20
    return 100 << 20             # v5e / v6e: 128 MiB physical


def _footprint_bytes(tm, D, V):
    """Conservative double-buffered VMEM footprint of one fused grid step."""
    return (
        2 * tm * 4               # src id tiles (double-buffered)
        + 2 * tm * 4             # tgt id tiles
        + 2 * V * D * 2          # resident bf16 embedding table (counted 2x)
        + 2 * D * V * 2          # resident bf16 output projection (counted 2x)
        + 2 * V * 4              # f32 bias row
        + 2 * tm * V * 4         # f32 logits output tiles
        + 2 * 128 * 4            # stats row tiles
        + tm * D * 6             # in-kernel (tm, D) activation (f32 + bf16)
        + tm * V * 8             # CE epilogue f32 temporaries
        + (2 << 20)              # compiler-internal scratch slack
    )


def _pick_tiling(M, D, V, tm_max=None):
    cap = _vmem_cap_bytes()
    if tm_max is None:
        tm_max = 512 if cap <= (48 << 20) else 1024   # per-generation default
    tm = min(_round_up(max(M, 1), 16), _round_up(tm_max, 16))
    # Prefer >= 2 row tiles so the grid can shard across both TensorCores (v7x).
    if tm >= _round_up(M, 16) and M > 16:
        tm = max(16, _round_up((M + 1) // 2, 16))
    while _footprint_bytes(tm, D, V) > cap and tm > 16:
        tm = max(16, _round_up(tm // 2, 16))
    fp = _footprint_bytes(tm, D, V)
    if fp > cap:
        # TODO(synk): resident (V, D)/(D, V) weights no longer fit VMEM; would
        # need a K-tiled accumulator variant for extremely large d_model.
        raise ValueError("d_model too large for the single-pass LM-head kernel")
    vmem_limit = int(min(max(fp + (4 << 20), 32 << 20), cap))
    m_pad = _round_up(max(M, 1), tm)
    return tm, m_pad, vmem_limit


# ----------------------------------------------------------------------------
# Kernel A (inference): fused embedding gather + LM head.
#   logits = onehot(src) @ E @ W + b   (onehot gather is exact for bf16 E)
# ----------------------------------------------------------------------------
def _fused_lm_head_kernel(src_ref, emb_ref, w_ref, b_ref, o_ref):
    tm, V = o_ref.shape
    ids = src_ref[...]                                        # (tm, 1) i32
    lane = jax.lax.broadcasted_iota(jnp.int32, (tm, V), 1)
    onehot = (lane == ids).astype(emb_ref.dtype)              # (tm, V) bf16
    x = jnp.dot(onehot, emb_ref[...],
                preferred_element_type=jnp.float32).astype(emb_ref.dtype)
    o_ref[...] = (jnp.dot(x, w_ref[...], preferred_element_type=jnp.float32)
                  + b_ref[...]).astype(o_ref.dtype)


def fused_lm_head_logits(src_flat, emb_bf16, w_bf16, b_f32, *, tm_max=None):
    M = src_flat.shape[0]
    V, D = emb_bf16.shape
    tm, m_pad, vmem_limit = _pick_tiling(M, D, V, tm_max)
    gm = m_pad // tm
    src_col = jnp.pad(src_flat, (0, m_pad - M)).reshape(m_pad, 1)

    logits = pl.pallas_call(
        _fused_lm_head_kernel,
        out_shape=jax.ShapeDtypeStruct((m_pad, V), jnp.float32),
        grid=(gm,),
        in_specs=[
            pl.BlockSpec((tm, 1), lambda i: (i, 0)),
            pl.BlockSpec((V, D), lambda i: (0, 0)),   # resident, DMA'd once
            pl.BlockSpec((D, V), lambda i: (0, 0)),   # resident, DMA'd once
            pl.BlockSpec((1, V), lambda i: (0, 0)),
        ],
        out_specs=pl.BlockSpec((tm, V), lambda i: (i, 0)),
        compiler_params=pltpu.CompilerParams(
            dimension_semantics=("parallel",),
            vmem_limit_bytes=vmem_limit),
    )(src_col, emb_bf16, w_bf16, b_f32)
    return logits[:M] if m_pad != M else logits


# ----------------------------------------------------------------------------
# Kernel B (training forward): fused embed + LM head + CE / accuracy epilogue.
#   Per row tile: write lane-dense (tm, V) f32 logits and a (1, 128) stats row
#     lane 0: sum of per-token CE, lane 1: #valid targets, lane 2: #correct.
# ----------------------------------------------------------------------------
def _fused_lm_head_loss_kernel(src_ref, tgt_ref, emb_ref, w_ref, b_ref,
                               o_ref, stats_ref):
    tm, V = o_ref.shape
    ids = src_ref[...]                                        # (tm, 1) i32
    lane = jax.lax.broadcasted_iota(jnp.int32, (tm, V), 1)

    # embedding gather as a one-hot MXU matmul (exact for bf16 tables)
    onehot = (lane == ids).astype(emb_ref.dtype)              # (tm, V) bf16
    x = jnp.dot(onehot, emb_ref[...],
                preferred_element_type=jnp.float32).astype(emb_ref.dtype)

    logits = jnp.dot(x, w_ref[...],
                     preferred_element_type=jnp.float32) + b_ref[...]
    # TODO(synk): emit logits as bf16 (or skip entirely) when only loss/accuracy
    # are consumed downstream; kept f32 to match the reference module output.
    o_ref[...] = logits.astype(o_ref.dtype)

    # ---- cross-entropy / accuracy epilogue (all f32 VPU/EUP work) ----
    tgt = tgt_ref[...]                                        # (tm, 1) i32
    valid = tgt >= 0                                          # (tm, 1)

    row_max = jnp.max(logits, axis=-1, keepdims=True)
    lse = jnp.log(jnp.sum(jnp.exp(logits - row_max), axis=-1,
                          keepdims=True)) + row_max

    hit = (lane == tgt) & valid                               # (tm, V)
    tgt_logit = jnp.sum(jnp.where(hit, logits, 0.0), axis=-1, keepdims=True)
    ce_per = jnp.where(valid, lse, 0.0) - tgt_logit           # (tm, 1)

    # argmax (first occurrence) via min-of-index trick
    pred = jnp.min(jnp.where(logits == row_max, lane, V),
                   axis=-1, keepdims=True)
    correct = (valid & (pred == tgt)).astype(jnp.float32)     # (tm, 1)

    ce_s = jnp.sum(ce_per, axis=0, keepdims=True)                       # (1,1)
    cnt_s = jnp.sum(valid.astype(jnp.float32), axis=0, keepdims=True)   # (1,1)
    hit_s = jnp.sum(correct, axis=0, keepdims=True)                     # (1,1)

    out_lane = jax.lax.broadcasted_iota(jnp.int32, (1, 128), 1)
    stats_ref[...] = jnp.where(
        out_lane == 0, ce_s,
        jnp.where(out_lane == 1, cnt_s,
                  jnp.where(out_lane == 2, hit_s, 0.0)))


def fused_lm_head_with_loss(src_flat, tgt_flat, emb_bf16, w_bf16, b_f32,
                            *, tm_max=None):
    M = src_flat.shape[0]
    V, D = emb_bf16.shape
    tm, m_pad, vmem_limit = _pick_tiling(M, D, V, tm_max)
    gm = m_pad // tm

    src_col = jnp.pad(src_flat, (0, m_pad - M)).reshape(m_pad, 1)
    tgt_col = jnp.pad(tgt_flat, (0, m_pad - M),
                      constant_values=PAD_ID).reshape(m_pad, 1)

    logits, stats = pl.pallas_call(
        _fused_lm_head_loss_kernel,
        out_shape=(
            jax.ShapeDtypeStruct((m_pad, V), jnp.float32),
            jax.ShapeDtypeStruct((1, 128 * gm), jnp.float32),
        ),
        grid=(gm,),
        in_specs=[
            pl.BlockSpec((tm, 1), lambda i: (i, 0)),
            pl.BlockSpec((tm, 1), lambda i: (i, 0)),
            pl.BlockSpec((V, D), lambda i: (0, 0)),   # resident, DMA'd once
            pl.BlockSpec((D, V), lambda i: (0, 0)),   # resident, DMA'd once
            pl.BlockSpec((1, V), lambda i: (0, 0)),
        ],
        out_specs=(
            pl.BlockSpec((tm, V), lambda i: (i, 0)),
            pl.BlockSpec((1, 128), lambda i: (0, i)),
        ),
        compiler_params=pltpu.CompilerParams(
            dimension_semantics=("parallel",),
            vmem_limit_bytes=vmem_limit),
    )(src_col, tgt_col, emb_bf16, w_bf16, b_f32)

    logits = logits[:M] if m_pad != M else logits
    st = stats.reshape(gm, 128)
    return logits, jnp.sum(st[:, 0]), jnp.sum(st[:, 1]), jnp.sum(st[:, 2])


# ----------------------------------------------------------------------------
# ARDiffusionModel forward
# ----------------------------------------------------------------------------
class ARDiffusionModelPallas:
    def __init__(self, vocab_size, d_model, aux_loss_weight=1.0, key=None,
                 tm_max=None):
        if key is None:
            key = jax.random.PRNGKey(42)
        ke, kw, kb = jax.random.split(key, 3)
        # Inner `self.module`: deterministic synthetic LM head.  Parameters are
        # stored directly in their kernel dtypes — no per-call f32->bf16 cast.
        self.embed = (0.02 * jax.random.normal(
            ke, (vocab_size, d_model), jnp.float32)).astype(jnp.bfloat16)
        self.w_out = (0.02 * jax.random.normal(
            kw, (d_model, vocab_size), jnp.float32)).astype(jnp.bfloat16)
        self.b_out = (0.02 * jax.random.normal(
            kb, (vocab_size,), jnp.float32)).reshape(1, vocab_size)
        self.aux_loss_weight = aux_loss_weight
        self.tm_max = tm_max

    def __call__(self, src, tgt):
        B, S = src.shape
        V = self.embed.shape[0]
        src = src.astype(jnp.int32)
        tgt = tgt.astype(jnp.int32)

        # Shift targets so flattened row (b, s) of the [B*S, V] logits pairs
        # with tgt[b, s+1]; the last position per sequence gets PAD_ID (masked
        # in-kernel).  Avoids the XLA logits[:, :-1, :].reshape(-1, V) copy.
        t_shift = jnp.concatenate(
            [tgt[:, 1:], jnp.full((B, 1), PAD_ID, dtype=jnp.int32)], axis=1)

        logits_flat, ce_sum, ce_cnt, n_correct = fused_lm_head_with_loss(
            src.reshape(-1), t_shift.reshape(-1),
            self.embed, self.w_out, self.b_out, tm_max=self.tm_max)
        logits = logits_flat.reshape(B, S, V)

        n_tokens = jnp.sum(tgt >= 0).astype(jnp.int32)
        n_seqs = jnp.int32(B)                  # torch.tensor(len(src))
        n_processed = n_tokens - jnp.int32(B)  # n_tokens - len(tgt)

        ce_loss = ce_sum / ce_cnt              # F.cross_entropy(mean, ignore<0)
        accuracy = n_correct / n_tokens.astype(jnp.float32)

        aux_loss = 0.0  # dict output has no 'aux_loss' -> .get default
        # hasattr(dict, 'aux_loss') is False -> other_metrics only has accuracy
        other_metrics = {"accuracy": accuracy}
        loss = ce_loss + self.aux_loss_weight * aux_loss

        return {
            "logits": logits,
            "loss": loss,
            OTHER_METRICS_KEY: other_metrics,
            "n_tokens": n_tokens,
            "n_seqs": n_seqs,
            "n_processed": n_processed,
        }

    def inference(self, src):
        # TODO(synk): torch eval()/inference_mode() have no Pallas analogue;
        # this just runs the logits-only fused kernel.
        B, S = src.shape
        V = self.embed.shape[0]
        logits_flat = fused_lm_head_logits(
            src.astype(jnp.int32).reshape(-1),
            self.embed, self.w_out, self.b_out, tm_max=self.tm_max)
        return logits_flat.reshape(B, S, V)


if __name__ == "__main__":
    B, S, D, V = 2, 8, 32, 128
    key = jax.random.PRNGKey(0)
    k_src, k_tgt, k_params = jax.random.split(key, 3)

    src = jax.random.randint(k_src, (B, S), 0, V, dtype=jnp.int32)
    tgt = jax.random.randint(k_tgt, (B, S), 0, V, dtype=jnp.int32)
    tgt = tgt.at[:, -2:].set(PAD_ID)  # some padded (ignored) positions

    model = ARDiffusionModelPallas(vocab_size=V, d_model=D, aux_loss_weight=1.0,
                                   key=k_params)
    out = model(src, tgt)
    jax.block_until_ready((out["logits"], out["loss"],
                           out[OTHER_METRICS_KEY]["accuracy"]))

    # (1) logits vs f32 reference over the stored (bf16) parameters — the MXU
    #     path uses exact bf16*bf16 products with f32 accumulation, so only
    #     summation-order differences remain.
    emb_f32 = model.embed.astype(jnp.float32)
    w_f32 = model.w_out.astype(jnp.float32)
    x_ref = jnp.take(emb_f32, src, axis=0)
    logits_ref = jnp.einsum("bsd,dv->bsv", x_ref, w_f32,
                            precision=jax.lax.Precision.HIGHEST) + model.b_out
    assert jnp.allclose(out["logits"], logits_ref, rtol=1e-4, atol=1e-4)

    # (2) CE / accuracy epilogue vs XLA ops applied to the kernel's own logits
    #     (identical inputs -> tight tolerance).
    lf = out["logits"][:, :-1, :].reshape(-1, V)
    tf = tgt[:, 1:].reshape(-1)
    valid = tf >= 0
    logp = jax.nn.log_softmax(lf.astype(jnp.float32), axis=-1)
    n_valid = jnp.sum(valid)
    ce_ref = -jnp.sum(jnp.where(valid, logp[jnp.arange(lf.shape[0]),
                                            jnp.clip(tf, 0)], 0.0)) / n_valid
    n_tok_ref = jnp.sum(tgt >= 0)
    acc_ref = jnp.sum((jnp.argmax(lf, axis=-1) == tf) & valid) / n_tok_ref
    assert jnp.allclose(out["loss"], ce_ref, rtol=1e-4, atol=1e-4)
    assert jnp.allclose(out[OTHER_METRICS_KEY]["accuracy"], acc_ref,
                        rtol=1e-5, atol=1e-5)
    assert int(out["n_tokens"]) == int(n_tok_ref)
    assert int(out["n_seqs"]) == B
    assert int(out["n_processed"]) == int(n_tok_ref) - B

    # (3) logits-only inference kernel matches the fused kernel's logits.
    infer_logits = model.inference(src)
    jax.block_until_ready(infer_logits)
    assert jnp.allclose(infer_logits, out["logits"], rtol=1e-5, atol=1e-5)

    print("KERNEL_OK")
</pallas_src>

<mosaic_0001>
module attributes {stable_mosaic.version = 11 : i64} {
  func.func @_fused_lm_head_loss_kernel(%arg0: i32, %arg1: memref<16x1xi32, #tpu.memory_space<vmem>>, %arg2: memref<16x1xi32, #tpu.memory_space<vmem>>, %arg3: memref<128x32xbf16, #tpu.memory_space<vmem>>, %arg4: memref<32x128xbf16, #tpu.memory_space<vmem>>, %arg5: memref<1x128xf32, #tpu.memory_space<vmem>>, %arg6: memref<16x128xf32, #tpu.memory_space<vmem>>, %arg7: memref<1x128xf32, #tpu.memory_space<vmem>>) attributes {dimension_semantics = [#tpu.dimension_semantics<parallel>], iteration_bounds = array<i64: 1>, scalar_prefetch = 0 : i64, scratch_operands = 0 : i64, tpu.core_type = #tpu.core_type<tc>, window_params = [{transform_indices = @transform_0, window_bounds = array<i64: 16, 1>}, {transform_indices = @transform_1, window_bounds = array<i64: 16, 1>}, {pipeline_mode = #tpu.pipeline_mode<synchronous>, transform_indices = @transform_2, window_bounds = array<i64: 128, 32>}, {pipeline_mode = #tpu.pipeline_mode<synchronous>, transform_indices = @transform_3, window_bounds = array<i64: 32, 128>}, {pipeline_mode = #tpu.pipeline_mode<synchronous>, transform_indices = @transform_4, window_bounds = array<i64: 1, 128>}, {transform_indices = @transform_5, window_bounds = array<i64: 16, 128>}, {transform_indices = @transform_6, window_bounds = array<i64: 1, 128>}]} {
    %c0 = arith.constant 0 : index
    %c0_0 = arith.constant 0 : index
    %0 = vector.load %arg1[%c0, %c0_0] : memref<16x1xi32, #tpu.memory_space<vmem>>, vector<16x1xi32>
    %1 = tpu.iota {dimensions = array<i32: 1>} : vector<16x128xi32>
    %2 = vector.broadcast %0 : vector<16x1xi32> to vector<16x128xi32>
    %3 = arith.cmpi eq, %1, %2 : vector<16x128xi32>
    %4 = arith.extui %3 : vector<16x128xi1> to vector<16x128xi32>
    %5 = arith.sitofp %4 : vector<16x128xi32> to vector<16x128xf32>
    %6 = arith.truncf %5 : vector<16x128xf32> to vector<16x128xbf16>
    %c0_1 = arith.constant 0 : index
    %c0_2 = arith.constant 0 : index
    %7 = vector.load %arg3[%c0_1, %c0_2] : memref<128x32xbf16, #tpu.memory_space<vmem>>, vector<128x32xbf16>
    %cst = arith.constant dense<0.000000e+00> : vector<16x32xf32>
    %8 = tpu.matmul %6, %7, %cst {dimension_numbers = #tpu.dot_dimension_numbers<[1], [0], [0], [1], [0, 0, 1, 1], [], []>} : vector<16x128xbf16>, vector<128x32xbf16>, vector<16x32xf32> -> vector<16x32xf32>
    %9 = arith.truncf %8 : vector<16x32xf32> to vector<16x32xbf16>
    %c0_3 = arith.constant 0 : index
    %c0_4 = arith.constant 0 : index
    %10 = vector.load %arg4[%c0_3, %c0_4] : memref<32x128xbf16, #tpu.memory_space<vmem>>, vector<32x128xbf16>
    %cst_5 = arith.constant dense<0.000000e+00> : vector<16x128xf32>
    %11 = tpu.matmul %9, %10, %cst_5 {dimension_numbers = #tpu.dot_dimension_numbers<[1], [0], [0], [1], [0, 0, 1, 1], [], []>} : vector<16x32xbf16>, vector<32x128xbf16>, vector<16x128xf32> -> vector<16x128xf32>
    %c0_6 = arith.constant 0 : index
    %c0_7 = arith.constant 0 : index
    %12 = vector.load %arg5[%c0_6, %c0_7] : memref<1x128xf32, #tpu.memory_space<vmem>>, vector<1x128xf32>
    %13 = vector.broadcast %12 : vector<1x128xf32> to vector<16x128xf32>
    %14 = arith.addf %11, %13 : vector<16x128xf32>
    %c0_8 = arith.constant 0 : index
    %c0_9 = arith.constant 0 : index
    %15 = vector.load %arg6[%c0_8, %c0_9] : memref<16x128xf32, #tpu.memory_space<vmem>>, vector<16x128xf32>
    tpu.vector_store %arg6[%c0_8, %c0_9], %14 {strides = array<i32>} : memref<16x128xf32, #tpu.memory_space<vmem>>, vector<16x128xf32>,
    %c0_10 = arith.constant 0 : index
    %c0_11 = arith.constant 0 : index
    %16 = vector.load %arg2[%c0_10, %c0_11] : memref<16x1xi32, #tpu.memory_space<vmem>>, vector<16x1xi32>
    %c0_i32 = arith.constant 0 : i32
    %17 = vector.broadcast %c0_i32 : i32 to vector<16x1xi32>
    %18 = arith.cmpi sge, %16, %17 : vector<16x1xi32>
    %cst_12 = arith.constant dense<0xFF800000> : vector<16xf32>
    %19 = vector.multi_reduction <maximumf>, %14, %cst_12 [1] : vector<16x128xf32> to vector<16xf32>
    %20 = vector.shape_cast %19 : vector<16xf32> to vector<16x1xf32>
    %21 = vector.broadcast %20 : vector<16x1xf32> to vector<16x128xf32>
    %22 = arith.subf %14, %21 : vector<16x128xf32>
    %23 = math.exp %22 : vector<16x128xf32>
    %cst_13 = arith.constant dense<0.000000e+00> : vector<16xf32>
    %24 = vector.multi_reduction <add>, %23, %cst_13 [1] : vector<16x128xf32> to vector<16xf32>
    %25 = vector.shape_cast %24 : vector<16xf32> to vector<16x1xf32>
    %26 = math.log %25 : vector<16x1xf32>
    %27 = arith.addf %26, %20 : vector<16x1xf32>
    %28 = vector.broadcast %16 : vector<16x1xi32> to vector<16x128xi32>
    %29 = arith.cmpi eq, %1, %28 : vector<16x128xi32>
    %30 = vector.broadcast %18 : vector<16x1xi1> to vector<16x128xi1>
    %31 = arith.andi %29, %30 : vector<16x128xi1>
    %cst_14 = arith.constant 0.000000e+00 : f32
    %32 = vector.broadcast %cst_14 : f32 to vector<16x128xf32>
    %33 = arith.select %31, %14, %32 : vector<16x128xi1>, vector<16x128xf32>
    %cst_15 = arith.constant dense<0.000000e+00> : vector<16xf32>
    %34 = vector.multi_reduction <add>, %33, %cst_15 [1] : vector<16x128xf32> to vector<16xf32>
    %35 = vector.shape_cast %34 : vector<16xf32> to vector<16x1xf32>
    %cst_16 = arith.constant 0.000000e+00 : f32
    %36 = vector.broadcast %cst_16 : f32 to vector<16x1xf32>
    %37 = arith.select %18, %27, %36 : vector<16x1xi1>, vector<16x1xf32>
    %38 = arith.subf %37, %35 : vector<16x1xf32>
    %39 = vector.broadcast %20 : vector<16x1xf32> to vector<16x128xf32>
    %40 = arith.cmpf oeq, %14, %39 : vector<16x128xf32>
    %c128_i32 = arith.constant 128 : i32
    %41 = vector.broadcast %c128_i32 : i32 to vector<16x128xi32>
    %42 = arith.select %40, %1, %41 : vector<16x128xi1>, vector<16x128xi32>
    %cst_17 = arith.constant dense<2147483647> : vector<16xi32>
    %43 = vector.multi_reduction <minsi>, %42, %cst_17 [1] : vector<16x128xi32> to vector<16xi32>
    %44 = vector.shape_cast %43 : vector<16xi32> to vector<16x1xi32>
    %45 = arith.cmpi eq, %44, %16 : vector<16x1xi32>
    %46 = arith.andi %18, %45 : vector<16x1xi1>
    %47 = arith.extui %46 : vector<16x1xi1> to vector<16x1xi32>
    %48 = arith.sitofp %47 : vector<16x1xi32> to vector<16x1xf32>
    %cst_18 = arith.constant dense<0.000000e+00> : vector<1xf32>
    %49 = vector.multi_reduction <add>, %38, %cst_18 [0] : vector<16x1xf32> to vector<1xf32>
    %50 = vector.shape_cast %49 : vector<1xf32> to vector<1x1xf32>
    %51 = arith.extui %18 : vector<16x1xi1> to vector<16x1xi32>
    %52 = arith.sitofp %51 : vector<16x1xi32> to vector<16x1xf32>
    %cst_19 = arith.constant dense<0.000000e+00> : vector<1xf32>
    %53 = vector.multi_reduction <add>, %52, %cst_19 [0] : vector<16x1xf32> to vector<1xf32>
    %54 = vector.shape_cast %53 : vector<1xf32> to vector<1x1xf32>
    %cst_20 = arith.constant dense<0.000000e+00> : vector<1xf32>
    %55 = vector.multi_reduction <add>, %48, %cst_20 [0] : vector<16x1xf32> to vector<1xf32>
    %56 = vector.shape_cast %55 : vector<1xf32> to vector<1x1xf32>
    %57 = tpu.iota {dimensions = array<i32: 1>} : vector<1x128xi32>
    %c0_i32_21 = arith.constant 0 : i32
    %58 = vector.broadcast %c0_i32_21 : i32 to vector<1x128xi32>
    %59 = arith.cmpi eq, %57, %58 : vector<1x128xi32>
    %c1_i32 = arith.constant 1 : i32
    %60 = vector.broadcast %c1_i32 : i32 to vector<1x128xi32>
    %61 = arith.cmpi eq, %57, %60 : vector<1x128xi32>
    %c2_i32 = arith.constant 2 : i32
    %62 = vector.broadcast %c2_i32 : i32 to vector<1x128xi32>
    %63 = arith.cmpi eq, %57, %62 : vector<1x128xi32>
    %cst_22 = arith.constant 0.000000e+00 : f32
    %64 = vector.shape_cast %56 : vector<1x1xf32> to vector<1x1xf32>
    %65 = vector.broadcast %64 : vector<1x1xf32> to vector<1x128xf32>
    %66 = vector.broadcast %cst_22 : f32 to vector<1x128xf32>
    %67 = arith.select %63, %65, %66 : vector<1x128xi1>, vector<1x128xf32>
    %68 = vector.shape_cast %54 : vector<1x1xf32> to vector<1x1xf32>
    %69 = vector.broadcast %68 : vector<1x1xf32> to vector<1x128xf32>
    %70 = arith.select %61, %69, %67 : vector<1x128xi1>, vector<1x128xf32>
    %71 = vector.shape_cast %50 : vector<1x1xf32> to vector<1x1xf32>
    %72 = vector.broadcast %71 : vector<1x1xf32> to vector<1x128xf32>
    %73 = arith.select %59, %72, %70 : vector<1x128xi1>, vector<1x128xf32>
    %c0_23 = arith.constant 0 : index
    %c0_24 = arith.constant 0 : index
    %74 = vector.load %arg7[%c0_23, %c0_24] : memref<1x128xf32, #tpu.memory_space<vmem>>, vector<1x128xf32>
    tpu.vector_store %arg7[%c0_23, %c0_24], %73 {strides = array<i32>} : memref<1x128xf32, #tpu.memory_space<vmem>>, vector<1x128xf32>,
    return
  }
  func.func @transform_0(%arg0: i32) -> (i32, i32) {
    %c0_i32 = arith.constant 0 : i32
    %c0_i32_0 = arith.constant 0 : i32
    return %arg0, %c0_i32 : i32, i32
  }
  func.func @transform_1(%arg0: i32) -> (i32, i32) {
    %c0_i32 = arith.constant 0 : i32
    %c0_i32_0 = arith.constant 0 : i32
    return %arg0, %c0_i32 : i32, i32
  }
  func.func @transform_2(%arg0: i32) -> (i32, i32) {
    %c0_i32 = arith.constant 0 : i32
    %c0_i32_0 = arith.constant 0 : i32
    %c0_i32_1 = arith.constant 0 : i32
    return %c0_i32, %c0_i32_0 : i32, i32
  }
  func.func @transform_3(%arg0: i32) -> (i32, i32) {
    %c0_i32 = arith.constant 0 : i32
    %c0_i32_0 = arith.constant 0 : i32
    %c0_i32_1 = arith.constant 0 : i32
    return %c0_i32, %c0_i32_0 : i32, i32
  }
  func.func @transform_4(%arg0: i32) -> (i32, i32) {
    %c0_i32 = arith.constant 0 : i32
    %c0_i32_0 = arith.constant 0 : i32
    %c0_i32_1 = arith.constant 0 : i32
    return %c0_i32, %c0_i32_0 : i32, i32
  }
  func.func @transform_5(%arg0: i32) -> (i32, i32) {
    %c0_i32 = arith.constant 0 : i32
    %c0_i32_0 = arith.constant 0 : i32
    return %arg0, %c0_i32 : i32, i32
  }
  func.func @transform_6(%arg0: i32) -> (i32, i32) {
    %c0_i32 = arith.constant 0 : i32
    %c0_i32_0 = arith.constant 0 : i32
    return %c0_i32, %arg0 : i32, i32
  }
}

</mosaic_0001>

<llo_original>
// kernel: tpu_custom_call.1
$region0: #{tpu_custom_call.1}
  #allocation0 [shape = 'u32[]', space=smem, size = 0x4, offset = 0x4, fixed_abs, tag = 'smem constant byte address 0x4 - core index']
  #allocation1 [shape = 'u32[144,128]{1,0:T(1,128)}', space=vmem, size = 0x12000, scoped, tag = 'internal scratch']
  %s0 = inlined_call_operand.vmem [shape: s32[16,1], index: 0, kind: input, shape index: {}]
  %s1 = inlined_call_operand.vmem [shape: s32[16,1], index: 1, kind: input, shape index: {}]
  %s2 = inlined_call_operand.vmem [shape: bf16[128,32], index: 2, kind: input, shape index: {}]
  %s3 = inlined_call_operand.vmem [shape: bf16[32,128], index: 3, kind: input, shape index: {}]
  %s4 = inlined_call_operand.vmem [shape: f32[1,128], index: 4, kind: input, shape index: {}]
  %s5 = inlined_call_operand.hbm [shape: f32[16,128], index: 5, kind: output, shape index: {0}]
  %s6 = inlined_call_operand.hbm [shape: f32[1,128], index: 6, kind: output, shape index: {1}]
  %7 = xla_tuple %s5, %s6
  %s8 = sld [smem:[#allocation0]]
  $region38: #{tpu_custom_call.1} parent=0
    _
  %s10 = ssub.s32 1, %s8
  %s11 = scalar_select 0, %s10, %s8
  $region1: #{tpu_custom_call.1} parent=0
    #allocation2 [shape = 'u8[8192]{0}', space=vmem, size = 0x2000, scoped, tag = 'output window, operand 0, single buffered']
    #allocation3 [shape = 's32[1]{0}', space=sflag, size = 0x4, scoped, tag = 'scoped memory for tpu_custom_call.1']
    #allocation4 [shape = 'u8[512]{0}', space=vmem, size = 0x400, scoped, tag = 'output window, operand 1, single buffered']
    #allocation5 [shape = 's32[1]{0}', space=sflag, size = 0x4, scoped, tag = 'scoped memory for tpu_custom_call.1']
    %12 = vsyncpa [#allocation3], 0
    %13 = vsyncpa [#allocation5], 0
    // Predicated region
    $region2: #{tpu_custom_call.1} parent=1 // pred_check
      _
    $region3: #{tpu_custom_call.1} parent=1 // pred_check_branch
      %15 = sbr.rel (0) target = $region5
    $region4: #{tpu_custom_call.1} parent=1 // pred_region
      _
    $region5: #{tpu_custom_call.1} parent=1 // pred_fallthru
      _
    // Predicated region
    $region6: #{tpu_custom_call.1} parent=1 // pred_check
      _
    $region7: #{tpu_custom_call.1} parent=1 // pred_check_branch
      %17 = sbr.rel (0) target = $region9
    $region8: #{tpu_custom_call.1} parent=1 // pred_region
      _
    $region9: #{tpu_custom_call.1} parent=1 // pred_fallthru
      _
    // Predicated region
    $region10: #{tpu_custom_call.1} parent=1 // pred_check
      _
    $region11: #{tpu_custom_call.1} parent=1 // pred_check_branch
      %19 = sbr.rel (0) target = $region13
    $region12: #{tpu_custom_call.1} parent=1 // pred_region
      _
    $region13: #{tpu_custom_call.1} parent=1 // pred_fallthru
      _
    // Predicated region
    $region14: #{tpu_custom_call.1} parent=1 // pred_check
      _
    $region15: #{tpu_custom_call.1} parent=1 // pred_check_branch
      %21 = sbr.rel (0) target = $region17
    $region16: #{tpu_custom_call.1} parent=1 // pred_region
      _
    $region17: #{tpu_custom_call.1} parent=1 // pred_fallthru
      _
    // Predicated region
    $region18: #{tpu_custom_call.1} parent=1 // pred_check
      _
    $region19: #{tpu_custom_call.1} parent=1 // pred_check_branch
      %23 = sbr.rel (0) target = $region21
    $region20: #{tpu_custom_call.1} parent=1 // pred_region
      _
    $region21: #{tpu_custom_call.1} parent=1 // pred_fallthru
      _
    %v25 = vld [vmem:[%s0] sm:$0xff]
    %v26 = vld [vmem:[%s0 + $0x8] sm:$0xff]
    %v27 = vlaneseq
    %v28 = vand.u32 %v27, 127
    %29 = vset.pattern.permute.xlu0 0
    %30 = vperm.xlu0 %29, %v25
    %v31 = vpop.permute.xlu0 %30
    %32 = vset.pattern.permute.xlu0 0
    %33 = vperm.xlu0 %32, %v26
    %v34 = vpop.permute.xlu0 %33
    %vm35 = vcmp.eq.s32.totalorder %v28, %v31
    %vm36 = vcmp.eq.s32.totalorder %v28, %v34
    %v37 = vsel %vm35, 1, 0
    %v38 = vsel %vm36, 1, 0
    %v39 = vcvt.s32.f32 %v37
    %v40 = vcvt.s32.f32 %v38
    %v41 = vpack.c.bf16 %v40, %v39
    %v42 = vld [vmem:[%s2] sm:$0xf]
    %v43 = vld [vmem:[%s2 + $0x4] sm:$0xf]
    %v44 = vld [vmem:[%s2 + $0x8] sm:$0xf]
    %v45 = vld [vmem:[%s2 + $0xc] sm:$0xf]
    %v46 = vld [vmem:[%s2 + $0x10] sm:$0xf]
    %v47 = vld [vmem:[%s2 + $0x14] sm:$0xf]
    %v48 = vld [vmem:[%s2 + $0x18] sm:$0xf]
    %v49 = vld [vmem:[%s2 + $0x1c] sm:$0xf]
    %v50 = vld [vmem:[%s2 + $0x20] sm:$0xf]
    %v51 = vld [vmem:[%s2 + $0x24] sm:$0xf]
    %v52 = vld [vmem:[%s2 + $0x28] sm:$0xf]
    %v53 = vld [vmem:[%s2 + $0x2c] sm:$0xf]
    %v54 = vld [vmem:[%s2 + $0x30] sm:$0xf]
    %v55 = vld [vmem:[%s2 + $0x34] sm:$0xf]
    %v56 = vld [vmem:[%s2 + $0x38] sm:$0xf]
    %v57 = vld [vmem:[%s2 + $0x3c] sm:$0xf]
    %v74 = vunpack.c.l.b16 %v42
    %v75 = vunpack.c.l.b16 %v43
    %v76 = vunpack.c.l.b16 %v44
    %v77 = vunpack.c.l.b16 %v45
    %v78 = vunpack.c.l.b16 %v46
    %v79 = vunpack.c.l.b16 %v47
    %v80 = vunpack.c.l.b16 %v48
    %v81 = vunpack.c.l.b16 %v49
    %v82 = vunpack.c.l.b16 %v50
    %v83 = vunpack.c.l.b16 %v51
    %v84 = vunpack.c.l.b16 %v52
    %v85 = vunpack.c.l.b16 %v53
    %v86 = vunpack.c.l.b16 %v54
    %v87 = vunpack.c.l.b16 %v55
    %v88 = vunpack.c.l.b16 %v56
    %v89 = vunpack.c.l.b16 %v57
    %v90 = vpack.c.b16 %v75, %v74
    %v91 = vpack.c.b16 %v77, %v76
    %v92 = vpack.c.b16 %v79, %v78
    %v93 = vpack.c.b16 %v81, %v80
    %v94 = vpack.c.b16 %v83, %v82
    %v95 = vpack.c.b16 %v85, %v84
    %v96 = vpack.c.b16 %v87, %v86
    %v97 = vpack.c.b16 %v89, %v88
    %106 = vmatprep.subr.bf16.mxu0 0
    %107 = vmatpush1.bf16.msra.mxu0 %v90
    %108 = vmatprep.subr.bf16.mxu0 0
    %109 = vmatpush1.bf16.msra.mxu0 %v91
    %110 = vmatprep.subr.bf16.mxu0 0
    %111 = vmatpush1.bf16.msra.mxu0 %v92
    %112 = vmatprep.subr.bf16.mxu0 0
    %113 = vmatpush1.bf16.msra.mxu0 %v93
    %114 = vmatprep.subr.bf16.mxu0 0
    %115 = vmatpush1.bf16.msra.mxu0 %v94
    %116 = vmatprep.subr.bf16.mxu0 0
    %117 = vmatpush1.bf16.msra.mxu0 %v95
    %118 = vmatprep.subr.bf16.mxu0 0
    %119 = vmatpush1.bf16.msra.mxu0 %v96
    %120 = vmatprep.subr.bf16.mxu0 0
    %121 = vmatpush1.bf16.msra.mxu0 %v97
    %122 = vmatprep.subr.bf16.mxu0 0
    %123 = vmatpush1.bf16.msra.mxu0 0
    %124 = vmatprep.subr.bf16.mxu0 0
    %125 = vmatpush1.bf16.msra.mxu0 0
    %126 = vmatprep.subr.bf16.mxu0 0
    %127 = vmatpush1.bf16.msra.mxu0 0
    %128 = vmatprep.subr.bf16.mxu0 0
    %129 = vmatpush1.bf16.msra.mxu0 0
    %130 = vmatprep.subr.bf16.mxu0 0
    %131 = vmatpush1.bf16.msra.mxu0 0
    %132 = vmatprep.subr.bf16.mxu0 0
    %133 = vmatpush1.bf16.msra.mxu0 0
    %134 = vmatprep.subr.bf16.mxu0 0
    %135 = vmatpush1.bf16.msra.mxu0 0
    %136 = vmatprep.subr.bf16.mxu0 0
    %137 = vmatpush1.bf16.msra.mxu0 0
    %138 = vmatprep.mubr.bf16.mxu0 0
    %139 = vmatmul.mubr.bf16.gmra.mrb[0].mxu0 %v41
    %v140 = vpop.f32.mrb[0].mxu0
    %v141 = vadd.f32 0.0, %v140
    %v142 = vpop.f32.mrb[0].mxu0
    %v143 = vpop.f32.mrb[0].mxu0
    %v144 = vadd.f32 0.0, %v143
    %v145 = vpop.f32.mrb[0].mxu0
    %146 = vdwg.mxu0
    %v147 = vpack.c.bf16 %v144, %v141
    %v148 = vld [vmem:[%s3] sm:$0xf]
    %v149 = vld [vmem:[%s3 + $0x4] sm:$0xf]
    %v150 = vld [vmem:[%s3 + $0x8] sm:$0xf]
    %v151 = vld [vmem:[%s3 + $0xc] sm:$0xf]
    %v152 = vld [vmem:[%s4] sm:$0x1]
    %v154 = vlaneseq
    %v155 = vshrl.u32 %v154, 7
    %v156 = vsub.s32 0, %v155
    %v157 = vrot.slane %v152, %v156
    %v163 = vunpack.c.l.b16 %v148
    %v164 = vunpack.c.l.b16 %v149
    %v165 = vunpack.c.l.b16 %v150
    %v166 = vunpack.c.l.b16 %v151
    %v167 = vpack.c.b16 %v164, %v163
    %v168 = vpack.c.b16 %v166, %v165
    %vm171 = vcmask 261120
    %v173 = vsel %vm171, %v147, 0
    %175 = vmatprep.subr.bf16.mxu0 0
    %176 = vmatpush1.bf16.msra.mxu0 %v167
    %177 = vmatprep.subr.bf16.mxu0 0
    %178 = vmatpush1.bf16.msra.mxu0 %v168
    %179 = vmatprep.subr.bf16.mxu0 0
    %180 = vmatpush1.bf16.msra.mxu0 0
    %181 = vmatprep.subr.bf16.mxu0 0
    %182 = vmatpush1.bf16.msra.mxu0 0
    %183 = vmatprep.subr.bf16.mxu0 0
    %184 = vmatpush1.bf16.msra.mxu0 0
    %185 = vmatprep.subr.bf16.mxu0 0
    %186 = vmatpush1.bf16.msra.mxu0 0
    %187 = vmatprep.subr.bf16.mxu0 0
    %188 = vmatpush1.bf16.msra.mxu0 0
    %189 = vmatprep.subr.bf16.mxu0 0
    %190 = vmatpush1.bf16.msra.mxu0 0
    %191 = vmatprep.subr.bf16.mxu0 0
    %192 = vmatpush1.bf16.msra.mxu0 0
    %193 = vmatprep.subr.bf16.mxu0 0
    %194 = vmatpush1.bf16.msra.mxu0 0
    %195 = vmatprep.subr.bf16.mxu0 0
    %196 = vmatpush1.bf16.msra.mxu0 0
    %197 = vmatprep.subr.bf16.mxu0 0
    %198 = vmatpush1.bf16.msra.mxu0 0
    %199 = vmatprep.subr.bf16.mxu0 0
    %200 = vmatpush1.bf16.msra.mxu0 0
    %201 = vmatprep.subr.bf16.mxu0 0
    %202 = vmatpush1.bf16.msra.mxu0 0
    %203 = vmatprep.subr.bf16.mxu0 0
    %204 = vmatpush1.bf16.msra.mxu0 0
    %205 = vmatprep.subr.bf16.mxu0 0
    %206 = vmatpush1.bf16.msra.mxu0 0
    %207 = vmatprep.mubr.bf16.mxu0 0
    %208 = vmatmul.mubr.bf16.gmra.mrb[0].mxu0 %v173
    %v209 = vpop.f32.mrb[0].mxu0
    %v210 = vadd.f32 %v157, %v209
    %v211 = vpop.f32.mrb[0].mxu0
    %v212 = vpop.f32.mrb[0].mxu0
    %v213 = vadd.f32 %v157, %v212
    %v214 = vpop.f32.mrb[0].mxu0
    %215 = vdwg.mxu0
    %216 = vst [vmem:[#allocation2] sm:$0xff] %v210
    %217 = vst [vmem:[#allocation2 + $0x8] sm:$0xff] %v213
    %v218 = vld [vmem:[%s1] sm:$0xff]
    %v219 = vld [vmem:[%s1 + $0x8] sm:$0xff]
    %vm220 = vcmp.ge.s32.totalorder %v218, 0
    %vm221 = vcmp.ge.s32.totalorder %v219, 0
    %222 = vmax.xlane.f32.xlu0 %v210
    %v223 = vpop.xlane.xlu0 %222
    %224 = vmax.xlane.f32.xlu0 %v213
    %v225 = vpop.xlane.xlu0 %224
    %v226 = vsub.f32 %v210, %v223
    %v227 = vsub.f32 %v213, %v225
    %v228 = vmul.f32 %v226, 1.442695
    %v229 = vpow.pop %v228
    %v230 = vmul.f32 %v227, 1.442695
    %v231 = vpow.pop %v230
    %232 = vadd.xlane.f32.xlu0 %v229
    %v233 = vpop.xlane.xlu0 %232
    %234 = vadd.xlane.f32.xlu0 %v231
    %v235 = vpop.xlane.xlu0 %234
    %v236 = vlog2.pop %v233
    %v237 = vmul.f32 %v236, 0.6931472
    %v238 = vlog2.pop %v235
    %v239 = vmul.f32 %v238, 0.6931472
    %v240 = vadd.f32 %v237, %v223
    %v241 = vadd.f32 %v239, %v225
    %242 = vset.pattern.permute.xlu0 0
    %243 = vperm.xlu0 %242, %v218
    %v244 = vpop.permute.xlu0 %243
    %245 = vset.pattern.permute.xlu0 0
    %246 = vperm.xlu0 %245, %v219
    %v247 = vpop.permute.xlu0 %246
    %vm248 = vcmp.eq.s32.totalorder %v28, %v244
    %vm249 = vcmp.eq.s32.totalorder %v28, %v247
    %v250 = vsel %vm220, 1, 0
    %v251 = vsel %vm221, 1, 0
    %252 = vset.pattern.permute.xlu0 0
    %253 = vperm.xlu0 %252, %v250
    %v254 = vpop.permute.xlu0 %253
    %255 = vset.pattern.permute.xlu0 0
    %256 = vperm.xlu0 %255, %v251
    %v257 = vpop.permute.xlu0 %256
    %vm258 = vcmp.eq.s32.totalorder %v254, 1
    %vm259 = vcmp.eq.s32.totalorder %v257, 1
    %vm260 = vmand %vm248, %vm258
    %vm261 = vmand %vm249, %vm259
    %v262 = vsel %vm260, %v210, 0.0
    %v263 = vsel %vm261, %v213, 0.0
    %264 = vadd.xlane.f32.xlu0 %v262
    %v265 = vpop.xlane.xlu0 %264
    %266 = vadd.xlane.f32.xlu0 %v263
    %v267 = vpop.xlane.xlu0 %266
    %v268 = vsel %vm220, %v240, 0.0
    %v269 = vsel %vm221, %v241, 0.0
    %v270 = vsub.f32 %v268, %v265
    %v271 = vsub.f32 %v269, %v267
    %vm272 = vcmp.eq.f32.partialorder %v210, %v223
    %vm273 = vcmp.eq.f32.partialorder %v213, %v225
    %v274 = vsel %vm272, %v28, 128
    %v275 = vsel %vm273, %v28, 128
    %v276 = vand.u32 %v274, 65535
    %v277 = vshra.s32 %v274, 16
    %v278 = vcvt.s32.f32 %v276
    %v279 = vcvt.s32.f32 %v277
    %280 = vmin.xlane.f32.xlu0 %v279
    %v281 = vpop.xlane.xlu0 %280
    %vm282 = vcmp.eq.f32.partialorder %v279, %v281
    %v283 = vsel %vm282, %v278, inf
    %284 = vmin.xlane.f32.xlu0 %v283
    %v285 = vpop.xlane.xlu0 %284
    %v286 = vcvt.f32.s32 %v285
    %v287 = vcvt.f32.s32 %v281
    %v288 = vshll.u32 %v287, 16
    %v289 = vadd.s32 %v288, %v286
    %v290 = vand.u32 %v275, 65535
    %v291 = vshra.s32 %v275, 16
    %v292 = vcvt.s32.f32 %v290
    %v293 = vcvt.s32.f32 %v291
    %294 = vmin.xlane.f32.xlu0 %v293
    %v295 = vpop.xlane.xlu0 %294
    %vm296 = vcmp.eq.f32.partialorder %v293, %v295
    %v297 = vsel %vm296, %v292, inf
    %298 = vmin.xlane.f32.xlu0 %v297
    %v299 = vpop.xlane.xlu0 %298
    %v300 = vcvt.f32.s32 %v299
    %v301 = vcvt.f32.s32 %v295
    %v302 = vshll.u32 %v301, 16
    %v303 = vadd.s32 %v302, %v300
    %vm304 = vcmp.eq.s32.totalorder %v289, %v218
    %vm305 = vcmp.eq.s32.totalorder %v303, %v219
    %vm306 = vmand %vm220, %vm304
    %vm307 = vmand %vm221, %vm305
    %v308 = vsel %vm306, 1, 0
    %v309 = vsel %vm307, 1, 0
    %v310 = vcvt.s32.f32 %v308
    %v311 = vcvt.s32.f32 %v309
    %vm312 = vcmask 7168
    %v313 = vsel %vm312, %v270, 0.0
    %v314 = vsel %vm312, %v271, 0.0
    %v315 = vadd.f32 %v313, %v314
    %v316 = vrot.slane %v315, 4
    %v317 = vadd.f32 %v315, %v316
    %v318 = vrot.slane %v317, 2
    %v319 = vadd.f32 %v317, %v318
    %v320 = vrot.slane %v319, 1
    %v321 = vadd.f32 %v319, %v320
    %v322 = vcvt.s32.f32 %v250
    %v323 = vcvt.s32.f32 %v251
    %v324 = vsel %vm312, %v322, 0.0
    %v325 = vsel %vm312, %v323, 0.0
    %v326 = vadd.f32 %v324, %v325
    %v327 = vrot.slane %v326, 4
    %v328 = vadd.f32 %v326, %v327
    %v329 = vrot.slane %v328, 2
    %v330 = vadd.f32 %v328, %v329
    %v331 = vrot.slane %v330, 1
    %v332 = vadd.f32 %v330, %v331
    %v333 = vsel %vm312, %v310, 0.0
    %v334 = vsel %vm312, %v311, 0.0
    %v335 = vadd.f32 %v333, %v334
    %v336 = vrot.slane %v335, 4
    %v337 = vadd.f32 %v335, %v336
    %v338 = vrot.slane %v337, 2
    %v339 = vadd.f32 %v337, %v338
    %v340 = vrot.slane %v339, 1
    %v341 = vadd.f32 %v339, %v340
    %vm342 = vcmp.eq.s32.totalorder %v28, 0
    %vm343 = vcmp.eq.s32.totalorder %v28, 1
    %vm344 = vcmp.eq.s32.totalorder %v28, 2
    %346 = vset.pattern.permute.xlu0 0
    %347 = vperm.xlu0 %346, %v341
    %v348 = vpop.permute.xlu0 %347
    %v350 = vsel %vm344, %v348, 0.0
    %352 = vset.pattern.permute.xlu0 0
    %353 = vperm.xlu0 %352, %v332
    %v354 = vpop.permute.xlu0 %353
    %v356 = vsel %vm343, %v354, %v350
    %358 = vset.pattern.permute.xlu0 0
    %359 = vperm.xlu0 %358, %v321
    %v360 = vpop.permute.xlu0 %359
    %v362 = vsel %vm342, %v360, %v356
    %363 = vst [vmem:[#allocation4] sm:$0x1] %v362
    // Predicated region
    $region22: #{tpu_custom_call.1} parent=1 // pred_check
      _
    $region23: #{tpu_custom_call.1} parent=1 // pred_check_branch
      %365 = sbr.rel (0) target = $region25
    $region24: #{tpu_custom_call.1} parent=1 // pred_region
      %s367 = ssub.s32 256, 256
      %368 = vsyncadd [#allocation3], %s367
      %s369 = sshll.u32 [#allocation2], 4
      %s370 = int_to_ptr.vmem [resolvable:$true] %s369
      %375 = dma.vmem_to_hbm [thread:$0]  %s370, 256, %s5, [#allocation3], 128, 128, 8
    $region25: #{tpu_custom_call.1} parent=1 // pred_fallthru
      _
    // Predicated region
    $region26: #{tpu_custom_call.1} parent=1 // pred_check
      _
    $region27: #{tpu_custom_call.1} parent=1 // pred_check_branch
      %377 = sbr.rel (0) target = $region29
    $region28: #{tpu_custom_call.1} parent=1 // pred_region
      %s379 = ssub.s32 16, 16
      %380 = vsyncadd [#allocation5], %s379
      %s382 = sshll.u32 [#allocation4], 4
      %s383 = int_to_ptr.vmem [resolvable:$true] %s382
      %385 = dma.vmem_to_hbm [thread:$0]  %s383, 16, %s6, [#allocation5]
    $region29: #{tpu_custom_call.1} parent=1 // pred_fallthru
      _
    // Predicated region
    $region30: #{tpu_custom_call.1} parent=1 // pred_check
      _
    $region31: #{tpu_custom_call.1} parent=1 // pred_check_branch
      %387 = sbr.rel (0) target = $region33
    $region32: #{tpu_custom_call.1} parent=1 // pred_region
      %388 = dma.done [#allocation3], 256
    $region33: #{tpu_custom_call.1} parent=1 // pred_fallthru
      _
    // Predicated region
    $region34: #{tpu_custom_call.1} parent=1 // pred_check
      _
    $region35: #{tpu_custom_call.1} parent=1 // pred_check_branch
      %390 = sbr.rel (0) target = $region37
    $region36: #{tpu_custom_call.1} parent=1 // pred_region
      %391 = dma.done [#allocation5], 16
    $region37: #{tpu_custom_call.1} parent=1 // pred_fallthru
      _
    %392 = vsyncpa [#allocation3], 1
    %393 = vsyncpa [#allocation5], 1

</llo_original>
